<compile_context>
chip_gen: v5e
topology: v5e:2x2
jax: 0.10.0
libtpu: 0.0.40
codegen_flags: <defaults>
</compile_context>

<pallas_src>
import jax
import jax.numpy as jnp
from jax import lax
from jax.experimental import pallas as pl
from jax.experimental.pallas import tpu as pltpu


# ---------------------------------------------------------------------------
# Stage A: fused 1x1-conv projections + mean-subtraction + global-norm + gamma.
# ---------------------------------------------------------------------------
def _proj_norm_kernel(x_ref, s_ref, wq_ref, bq_ref, wvk_ref, bvk_ref, gamma_ref,
                      qhat_ref, khat_ref, vg_ref):
    # x_ref, s_ref : (B, C, N);  wq (C8, C), bq (C8, 1)
    # wvk = [wv; wk] (C + C8, C), bvk (C + C8, 1);  gamma (1,) in SMEM
    B, C, _ = x_ref.shape

    # ---- per-batch channel-mixing matmuls on the MXU (B is a small static int)
    for b in range(B):
        qhat_ref[b] = (jnp.dot(wq_ref[...], s_ref[b],
                               preferred_element_type=jnp.float32) + bq_ref[...])
        vk = (jnp.dot(wvk_ref[...], x_ref[b],
                      preferred_element_type=jnp.float32) + bvk_ref[...])
        vg_ref[b] = gamma_ref[0] * vk[:C, :]      # fold gamma into V up-front
        khat_ref[b] = vk[C:, :]

    # ---- torch-style broadcast: (B, C8, N) - (B, N); valid when B == C8 (or B == 1)
    q = qhat_ref[...]
    k = khat_ref[...]
    q_hat = q - jnp.mean(q, axis=1)
    k_hat = k - jnp.mean(k, axis=1)
    # Fold 1/(||q_hat||_F * ||k_hat||_F) into q_hat so the gridded attention
    # kernel never rescales (TQ, N) energy tiles.  (No epsilon, same as torch.)
    inv_denom = lax.rsqrt(jnp.sum(q_hat * q_hat) * jnp.sum(k_hat * k_hat))
    qhat_ref[...] = q_hat * inv_denom
    khat_ref[...] = k_hat


# ---------------------------------------------------------------------------
# Stage B: attention, gridded over (batch, query tiles).
# ---------------------------------------------------------------------------
def _attn_kernel(qhat_ref, khat_ref, vg_ref, x_ref, out_ref, attn_ref):
    # qhat_ref (C8, TQ), khat_ref (C8, N), vg_ref (C, N), x_ref (C, TQ)
    # out_ref (C, TQ), attn_ref (TQ, N)
    energy = lax.dot_general(
        qhat_ref[...], khat_ref[...],
        dimension_numbers=(((0,), (0,)), ((), ())),
        preferred_element_type=jnp.float32)                      # (TQ, N)
    m = jnp.max(energy, axis=-1, keepdims=True)
    p = jnp.exp(energy - m)
    # softmax denominator reciprocal on the EUP (free slot next to the exp)
    att = p * pl.reciprocal(jnp.sum(p, axis=-1, keepdims=True), approx=True)
    attn_ref[...] = att
    o = lax.dot_general(
        vg_ref[...], att,
        dimension_numbers=(((1,), (1,)), ((), ())),
        preferred_element_type=jnp.float32)                      # (C, TQ)
    out_ref[...] = o + x_ref[...]


def _pick_tq(n):
    for t in (512, 256, 128):
        if n % t == 0:
            return t
    return n   # small / oddly-sized maps fall back to a single query tile
    # TODO(synk): pad W*H to a multiple of 128 (with key masking) so stores stay
    # lane-dense for arbitrary spatial sizes.


def self_attn_forward(x, style_attn, wq, bq, wk, bk, wv, bv, gamma, *, tq=None):
    """x, style_attn: (B, C, W, H).  Returns (out (B,C,W,H), attention (B,N,N))."""
    B, C, W, H = x.shape
    C8 = wq.shape[0]
    N = W * H
    f32 = jnp.float32

    x_f = x.reshape(B, C, N).astype(f32)
    s_f = style_attn.reshape(B, C, N).astype(f32)
    wq_f = wq.astype(f32)
    wvk = jnp.concatenate([wv, wk], axis=0).astype(f32)          # (C + C8, C)
    bq2 = bq.reshape(C8, 1).astype(f32)
    bvk = jnp.concatenate([bv, bk], axis=0).reshape(C + C8, 1).astype(f32)
    gamma = jnp.asarray(gamma, f32).reshape((1,))

    # ---- stage A: fused projections + normalization (single shot) ---------
    stage_a_elems = (2 * C + 2 * C8 + C) * B * N + (2 * C8 + C) * (C + 1)
    vmem_a = int(min(max(2 * 4 * stage_a_elems, 32 * 1024 * 1024),
                     64 * 1024 * 1024))

    qhat, khat, vg = pl.pallas_call(
        _proj_norm_kernel,
        in_specs=[pl.BlockSpec(memory_space=pltpu.MemorySpace.VMEM)] * 6
                 + [pl.BlockSpec(memory_space=pltpu.MemorySpace.SMEM)],
        out_specs=(pl.BlockSpec(memory_space=pltpu.MemorySpace.VMEM),) * 3,
        out_shape=(jax.ShapeDtypeStruct((B, C8, N), f32),   # q_hat (pre-scaled)
                   jax.ShapeDtypeStruct((B, C8, N), f32),   # k_hat
                   jax.ShapeDtypeStruct((B, C, N), f32)),   # gamma * v
        compiler_params=pltpu.CompilerParams(vmem_limit_bytes=vmem_a),
    )(x_f, s_f, wq_f, bq2, wvk, bvk, gamma)

    # ---- stage B: attention, gridded over (batch, query tiles) ------------
    if tq is None:
        tq = _pick_tq(N)
    assert N % tq == 0, f"query tile {tq} must divide N={N}"
    grid = (B, N // tq)

    # double-buffered blocks + (TQ,N) softmax intermediates, clamped to what
    # every generation (incl. v7x's 64 MiB VMEM) can provide.
    block_elems = C8 * tq + C8 * N + C * N + 3 * C * tq + 2 * tq * N
    vmem_b = int(min(max(4 * 4 * block_elems, 32 * 1024 * 1024),
                     64 * 1024 * 1024))

    out_f, attn = pl.pallas_call(
        _attn_kernel,
        grid=grid,
        in_specs=[
            pl.BlockSpec((None, C8, tq), lambda b, i: (b, 0, i)),   # q_hat (pre-scaled)
            pl.BlockSpec((None, C8, N), lambda b, i: (b, 0, 0)),    # k_hat
            pl.BlockSpec((None, C, N), lambda b, i: (b, 0, 0)),     # gamma * v
            pl.BlockSpec((None, C, tq), lambda b, i: (b, 0, i)),    # x residual
        ],
        out_specs=(
            pl.BlockSpec((None, C, tq), lambda b, i: (b, 0, i)),    # out
            pl.BlockSpec((None, tq, N), lambda b, i: (b, i, 0)),    # attention
        ),
        out_shape=(jax.ShapeDtypeStruct((B, C, N), f32),
                   jax.ShapeDtypeStruct((B, N, N), f32)),
        compiler_params=pltpu.CompilerParams(
            dimension_semantics=("parallel", "parallel"),
            vmem_limit_bytes=vmem_b),
    )(qhat, khat, vg, x_f)

    return out_f.reshape(B, C, W, H), attn


def _reference(x, style, wq, bq, wk, bk, wv, bv, gamma):
    """Plain-JAX reference mirroring the PyTorch forward, for validation."""
    B, C, W, H = x.shape
    N = W * H

    def conv1x1(inp, w, b_):
        return jnp.einsum('oc,bcn->bon', w, inp.reshape(B, C, N)) + b_[None, :, None]

    q = conv1x1(style, wq, bq)
    k = conv1x1(x, wk, bk)
    v = conv1x1(x, wv, bv)
    qh = q - jnp.mean(q, axis=1)
    kh = k - jnp.mean(k, axis=1)
    energy = jnp.einsum('bcn,bcm->bnm', qh, kh) / (jnp.linalg.norm(qh) * jnp.linalg.norm(kh))
    att = jax.nn.softmax(energy, axis=-1)
    out = jnp.einsum('bcn,bmn->bcm', v, att).reshape(B, C, W, H)
    out = gamma[0] * out + x
    return out, att


if __name__ == "__main__":
    # B must equal C//8 (or 1) for the module's broadcast to be valid (see note).
    # W*H = 256 -> lane-dense (multiple of 128) attention rows.
    B, C, W, H = 2, 16, 16, 16
    C8 = C // 8
    N = W * H

    key = jax.random.PRNGKey(0)
    ks = jax.random.split(key, 8)
    x = jax.random.normal(ks[0], (B, C, W, H), jnp.float32)
    style_attn = jax.random.normal(ks[1], (B, C, W, H), jnp.float32)

    # Parameters (Conv2d 1x1 weights stored as (out_ch, in_ch)); deterministic init.
    wq = jax.random.normal(ks[2], (C8, C), jnp.float32) * 0.1
    bq = jax.random.normal(ks[3], (C8,), jnp.float32) * 0.1
    wk = jax.random.normal(ks[4], (C8, C), jnp.float32) * 0.1
    bk = jax.random.normal(ks[5], (C8,), jnp.float32) * 0.1
    wv = jax.random.normal(ks[6], (C, C), jnp.float32) * 0.1
    bv = jax.random.normal(ks[7], (C,), jnp.float32) * 0.1
    # The module inits gamma to 0 (shape (1,)); use a nonzero value so the
    # attention path actually affects `out` in this synthetic test.
    gamma = jnp.array([0.5], jnp.float32)

    # tq=128 exercises the (batch, query-tile) grid: grid = (2, 2).
    out, attn = self_attn_forward(x, style_attn, wq, bq, wk, bk, wv, bv, gamma, tq=128)
    jax.block_until_ready((out, attn))

    out_ref, attn_ref = _reference(x, style_attn, wq, bq, wk, bk, wv, bv, gamma)

    assert out.shape == (B, C, W, H)
    assert attn.shape == (B, N, N)
    # Tolerances allow the EUP approximate reciprocal in the softmax epilogue.
    assert bool(jnp.allclose(out, out_ref, atol=5e-4, rtol=5e-4)), "out mismatch vs reference"
    assert bool(jnp.allclose(attn, attn_ref, atol=5e-5, rtol=2e-3)), "attention mismatch vs reference"

    print("KERNEL_OK")
</pallas_src>

<mosaic_0001>
module attributes {stable_mosaic.version = 11 : i64} {
  func.func @_proj_norm_kernel(%arg0: memref<2x16x256xf32, #tpu.memory_space<vmem>>, %arg1: memref<2x16x256xf32, #tpu.memory_space<vmem>>, %arg2: memref<2x16xf32, #tpu.memory_space<vmem>>, %arg3: memref<2x1xf32, #tpu.memory_space<vmem>>, %arg4: memref<18x16xf32, #tpu.memory_space<vmem>>, %arg5: memref<18x1xf32, #tpu.memory_space<vmem>>, %arg6: memref<1xf32, #tpu.memory_space<smem>>, %arg7: memref<2x2x256xf32, #tpu.memory_space<vmem>>, %arg8: memref<2x2x256xf32, #tpu.memory_space<vmem>>, %arg9: memref<2x16x256xf32, #tpu.memory_space<vmem>>) attributes {dimension_semantics = [], scalar_prefetch = 0 : i64, scratch_operands = 0 : i64, tpu.core_type = #tpu.core_type<tc>} {
    %c0 = arith.constant 0 : index
    %c0_0 = arith.constant 0 : index
    %0 = vector.load %arg2[%c0, %c0_0] : memref<2x16xf32, #tpu.memory_space<vmem>>, vector<2x16xf32>
    %c0_1 = arith.constant 0 : index
    %c0_2 = arith.constant 0 : index
    %c0_3 = arith.constant 0 : index
    %1 = vector.load %arg1[%c0_1, %c0_2, %c0_3] : memref<2x16x256xf32, #tpu.memory_space<vmem>>, vector<1x16x256xf32>
    %2 = vector.shape_cast %1 : vector<1x16x256xf32> to vector<16x256xf32>
    %cst = arith.constant dense<0.000000e+00> : vector<2x256xf32>
    %3 = tpu.matmul %0, %2, %cst {dimension_numbers = #tpu.dot_dimension_numbers<[1], [0], [0], [1], [0, 0, 1, 1], [], []>} : vector<2x16xf32>, vector<16x256xf32>, vector<2x256xf32> -> vector<2x256xf32>
    %c0_4 = arith.constant 0 : index
    %c0_5 = arith.constant 0 : index
    %4 = vector.load %arg3[%c0_4, %c0_5] : memref<2x1xf32, #tpu.memory_space<vmem>>, vector<2x1xf32>
    %5 = vector.broadcast %4 : vector<2x1xf32> to vector<2x256xf32>
    %6 = arith.addf %3, %5 : vector<2x256xf32>
    %c0_6 = arith.constant 0 : index
    %c0_7 = arith.constant 0 : index
    %c0_8 = arith.constant 0 : index
    %7 = vector.load %arg7[%c0_6, %c0_7, %c0_8] : memref<2x2x256xf32, #tpu.memory_space<vmem>>, vector<1x2x256xf32>
    %8 = vector.shape_cast %7 : vector<1x2x256xf32> to vector<2x256xf32>
    %9 = vector.shape_cast %6 : vector<2x256xf32> to vector<1x2x256xf32>
    tpu.vector_store %arg7[%c0_6, %c0_7, %c0_8], %9 {strides = array<i32>} : memref<2x2x256xf32, #tpu.memory_space<vmem>>, vector<1x2x256xf32>,
    %c0_9 = arith.constant 0 : index
    %c0_10 = arith.constant 0 : index
    %10 = vector.load %arg4[%c0_9, %c0_10] : memref<18x16xf32, #tpu.memory_space<vmem>>, vector<18x16xf32>
    %c0_11 = arith.constant 0 : index
    %c0_12 = arith.constant 0 : index
    %c0_13 = arith.constant 0 : index
    %11 = vector.load %arg0[%c0_11, %c0_12, %c0_13] : memref<2x16x256xf32, #tpu.memory_space<vmem>>, vector<1x16x256xf32>
    %12 = vector.shape_cast %11 : vector<1x16x256xf32> to vector<16x256xf32>
    %cst_14 = arith.constant dense<0.000000e+00> : vector<18x256xf32>
    %13 = tpu.matmul %10, %12, %cst_14 {dimension_numbers = #tpu.dot_dimension_numbers<[1], [0], [0], [1], [0, 0, 1, 1], [], []>} : vector<18x16xf32>, vector<16x256xf32>, vector<18x256xf32> -> vector<18x256xf32>
    %c0_15 = arith.constant 0 : index
    %c0_16 = arith.constant 0 : index
    %14 = vector.load %arg5[%c0_15, %c0_16] : memref<18x1xf32, #tpu.memory_space<vmem>>, vector<18x1xf32>
    %15 = vector.broadcast %14 : vector<18x1xf32> to vector<18x256xf32>
    %16 = arith.addf %13, %15 : vector<18x256xf32>
    %c0_17 = arith.constant 0 : index
    %17 = memref.load %arg6[%c0_17] : memref<1xf32, #tpu.memory_space<smem>>
    %18 = vector.extract_strided_slice %16 {offsets = [0, 0], sizes = [16, 256], strides = [1, 1]} : vector<18x256xf32> to vector<16x256xf32>
    %19 = vector.broadcast %17 : f32 to vector<16x256xf32>
    %20 = arith.mulf %19, %18 : vector<16x256xf32>
    %c0_18 = arith.constant 0 : index
    %c0_19 = arith.constant 0 : index
    %c0_20 = arith.constant 0 : index
    %21 = vector.load %arg9[%c0_18, %c0_19, %c0_20] : memref<2x16x256xf32, #tpu.memory_space<vmem>>, vector<1x16x256xf32>
    %22 = vector.shape_cast %21 : vector<1x16x256xf32> to vector<16x256xf32>
    %23 = vector.shape_cast %20 : vector<16x256xf32> to vector<1x16x256xf32>
    tpu.vector_store %arg9[%c0_18, %c0_19, %c0_20], %23 {strides = array<i32>} : memref<2x16x256xf32, #tpu.memory_space<vmem>>, vector<1x16x256xf32>,
    %24 = vector.extract_strided_slice %16 {offsets = [16, 0], sizes = [2, 256], strides = [1, 1]} : vector<18x256xf32> to vector<2x256xf32>
    %c0_21 = arith.constant 0 : index
    %c0_22 = arith.constant 0 : index
    %c0_23 = arith.constant 0 : index
    %25 = vector.load %arg8[%c0_21, %c0_22, %c0_23] : memref<2x2x256xf32, #tpu.memory_space<vmem>>, vector<1x2x256xf32>
    %26 = vector.shape_cast %25 : vector<1x2x256xf32> to vector<2x256xf32>
    %27 = vector.shape_cast %24 : vector<2x256xf32> to vector<1x2x256xf32>
    tpu.vector_store %arg8[%c0_21, %c0_22, %c0_23], %27 {strides = array<i32>} : memref<2x2x256xf32, #tpu.memory_space<vmem>>, vector<1x2x256xf32>,
    %c0_24 = arith.constant 0 : index
    %c0_25 = arith.constant 0 : index
    %28 = vector.load %arg2[%c0_24, %c0_25] : memref<2x16xf32, #tpu.memory_space<vmem>>, vector<2x16xf32>
    %c1 = arith.constant 1 : index
    %c0_26 = arith.constant 0 : index
    %c0_27 = arith.constant 0 : index
    %29 = vector.load %arg1[%c1, %c0_26, %c0_27] : memref<2x16x256xf32, #tpu.memory_space<vmem>>, vector<1x16x256xf32>
    %30 = vector.shape_cast %29 : vector<1x16x256xf32> to vector<16x256xf32>
    %cst_28 = arith.constant dense<0.000000e+00> : vector<2x256xf32>
    %31 = tpu.matmul %28, %30, %cst_28 {dimension_numbers = #tpu.dot_dimension_numbers<[1], [0], [0], [1], [0, 0, 1, 1], [], []>} : vector<2x16xf32>, vector<16x256xf32>, vector<2x256xf32> -> vector<2x256xf32>
    %c0_29 = arith.constant 0 : index
    %c0_30 = arith.constant 0 : index
    %32 = vector.load %arg3[%c0_29, %c0_30] : memref<2x1xf32, #tpu.memory_space<vmem>>, vector<2x1xf32>
    %33 = vector.broadcast %32 : vector<2x1xf32> to vector<2x256xf32>
    %34 = arith.addf %31, %33 : vector<2x256xf32>
    %c1_31 = arith.constant 1 : index
    %c0_32 = arith.constant 0 : index
    %c0_33 = arith.constant 0 : index
    %35 = vector.load %arg7[%c1_31, %c0_32, %c0_33] : memref<2x2x256xf32, #tpu.memory_space<vmem>>, vector<1x2x256xf32>
    %36 = vector.shape_cast %35 : vector<1x2x256xf32> to vector<2x256xf32>
    %37 = vector.shape_cast %34 : vector<2x256xf32> to vector<1x2x256xf32>
    tpu.vector_store %arg7[%c1_31, %c0_32, %c0_33], %37 {strides = array<i32>} : memref<2x2x256xf32, #tpu.memory_space<vmem>>, vector<1x2x256xf32>,
    %c0_34 = arith.constant 0 : index
    %c0_35 = arith.constant 0 : index
    %38 = vector.load %arg4[%c0_34, %c0_35] : memref<18x16xf32, #tpu.memory_space<vmem>>, vector<18x16xf32>
    %c1_36 = arith.constant 1 : index
    %c0_37 = arith.constant 0 : index
    %c0_38 = arith.constant 0 : index
    %39 = vector.load %arg0[%c1_36, %c0_37, %c0_38] : memref<2x16x256xf32, #tpu.memory_space<vmem>>, vector<1x16x256xf32>
    %40 = vector.shape_cast %39 : vector<1x16x256xf32> to vector<16x256xf32>
    %cst_39 = arith.constant dense<0.000000e+00> : vector<18x256xf32>
    %41 = tpu.matmul %38, %40, %cst_39 {dimension_numbers = #tpu.dot_dimension_numbers<[1], [0], [0], [1], [0, 0, 1, 1], [], []>} : vector<18x16xf32>, vector<16x256xf32>, vector<18x256xf32> -> vector<18x256xf32>
    %c0_40 = arith.constant 0 : index
    %c0_41 = arith.constant 0 : index
    %42 = vector.load %arg5[%c0_40, %c0_41] : memref<18x1xf32, #tpu.memory_space<vmem>>, vector<18x1xf32>
    %43 = vector.broadcast %42 : vector<18x1xf32> to vector<18x256xf32>
    %44 = arith.addf %41, %43 : vector<18x256xf32>
    %c0_42 = arith.constant 0 : index
    %45 = memref.load %arg6[%c0_42] : memref<1xf32, #tpu.memory_space<smem>>
    %46 = vector.extract_strided_slice %44 {offsets = [0, 0], sizes = [16, 256], strides = [1, 1]} : vector<18x256xf32> to vector<16x256xf32>
    %47 = vector.broadcast %45 : f32 to vector<16x256xf32>
    %48 = arith.mulf %47, %46 : vector<16x256xf32>
    %c1_43 = arith.constant 1 : index
    %c0_44 = arith.constant 0 : index
    %c0_45 = arith.constant 0 : index
    %49 = vector.load %arg9[%c1_43, %c0_44, %c0_45] : memref<2x16x256xf32, #tpu.memory_space<vmem>>, vector<1x16x256xf32>
    %50 = vector.shape_cast %49 : vector<1x16x256xf32> to vector<16x256xf32>
    %51 = vector.shape_cast %48 : vector<16x256xf32> to vector<1x16x256xf32>
    tpu.vector_store %arg9[%c1_43, %c0_44, %c0_45], %51 {strides = array<i32>} : memref<2x16x256xf32, #tpu.memory_space<vmem>>, vector<1x16x256xf32>,
    %52 = vector.extract_strided_slice %44 {offsets = [16, 0], sizes = [2, 256], strides = [1, 1]} : vector<18x256xf32> to vector<2x256xf32>
    %c1_46 = arith.constant 1 : index
    %c0_47 = arith.constant 0 : index
    %c0_48 = arith.constant 0 : index
    %53 = vector.load %arg8[%c1_46, %c0_47, %c0_48] : memref<2x2x256xf32, #tpu.memory_space<vmem>>, vector<1x2x256xf32>
    %54 = vector.shape_cast %53 : vector<1x2x256xf32> to vector<2x256xf32>
    %55 = vector.shape_cast %52 : vector<2x256xf32> to vector<1x2x256xf32>
    tpu.vector_store %arg8[%c1_46, %c0_47, %c0_48], %55 {strides = array<i32>} : memref<2x2x256xf32, #tpu.memory_space<vmem>>, vector<1x2x256xf32>,
    %c0_49 = arith.constant 0 : index
    %c0_50 = arith.constant 0 : index
    %c0_51 = arith.constant 0 : index
    %56 = vector.load %arg7[%c0_49, %c0_50, %c0_51] : memref<2x2x256xf32, #tpu.memory_space<vmem>>, vector<2x2x256xf32>
    %c0_52 = arith.constant 0 : index
    %c0_53 = arith.constant 0 : index
    %c0_54 = arith.constant 0 : index
    %57 = vector.load %arg8[%c0_52, %c0_53, %c0_54] : memref<2x2x256xf32, #tpu.memory_space<vmem>>, vector<2x2x256xf32>
    %cst_55 = arith.constant dense<0.000000e+00> : vector<2x256xf32>
    %58 = vector.multi_reduction <add>, %56, %cst_55 [1] : vector<2x2x256xf32> to vector<2x256xf32>
    %cst_56 = arith.constant 2.000000e+00 : f32
    %59 = vector.broadcast %cst_56 : f32 to vector<2x256xf32>
    %60 = arith.divf %58, %59 : vector<2x256xf32>
    %61 = vector.shape_cast %60 : vector<2x256xf32> to vector<1x2x256xf32>
    %62 = vector.broadcast %61 : vector<1x2x256xf32> to vector<2x2x256xf32>
    %63 = arith.subf %56, %62 : vector<2x2x256xf32>
    %cst_57 = arith.constant dense<0.000000e+00> : vector<2x256xf32>
    %64 = vector.multi_reduction <add>, %57, %cst_57 [1] : vector<2x2x256xf32> to vector<2x256xf32>
    %cst_58 = arith.constant 2.000000e+00 : f32
    %65 = vector.broadcast %cst_58 : f32 to vector<2x256xf32>
    %66 = arith.divf %64, %65 : vector<2x256xf32>
    %67 = vector.shape_cast %66 : vector<2x256xf32> to vector<1x2x256xf32>
    %68 = vector.broadcast %67 : vector<1x2x256xf32> to vector<2x2x256xf32>
    %69 = arith.subf %57, %68 : vector<2x2x256xf32>
    %70 = arith.mulf %63, %63 : vector<2x2x256xf32>
    %71 = vector.shape_cast %70 : vector<2x2x256xf32> to vector<1x2x2x256xf32>
    %cst_59 = arith.constant dense<0.000000e+00> : vector<1xf32>
    %72 = vector.multi_reduction <add>, %71, %cst_59 [1, 2, 3] : vector<1x2x2x256xf32> to vector<1xf32>
    %73 = vector.shape_cast %72 : vector<1xf32> to vector<1x1x1x1xf32>
    %74 = vector.extract %73[0, 0, 0, 0] : f32 from vector<1x1x1x1xf32>
    %75 = arith.mulf %69, %69 : vector<2x2x256xf32>
    %76 = vector.shape_cast %75 : vector<2x2x256xf32> to vector<1x2x2x256xf32>
    %cst_60 = arith.constant dense<0.000000e+00> : vector<1xf32>
    %77 = vector.multi_reduction <add>, %76, %cst_60 [1, 2, 3] : vector<1x2x2x256xf32> to vector<1xf32>
    %78 = vector.shape_cast %77 : vector<1xf32> to vector<1x1x1x1xf32>
    %79 = vector.extract %78[0, 0, 0, 0] : f32 from vector<1x1x1x1xf32>
    %80 = arith.mulf %74, %79 : f32
    %81 = math.rsqrt %80 : f32
    %82 = vector.broadcast %81 : f32 to vector<2x2x256xf32>
    %83 = arith.mulf %63, %82 : vector<2x2x256xf32>
    %c0_61 = arith.constant 0 : index
    %c0_62 = arith.constant 0 : index
    %c0_63 = arith.constant 0 : index
    %84 = vector.load %arg7[%c0_61, %c0_62, %c0_63] : memref<2x2x256xf32, #tpu.memory_space<vmem>>, vector<2x2x256xf32>
    tpu.vector_store %arg7[%c0_61, %c0_62, %c0_63], %83 {strides = array<i32>} : memref<2x2x256xf32, #tpu.memory_space<vmem>>, vector<2x2x256xf32>,
    %c0_64 = arith.constant 0 : index
    %c0_65 = arith.constant 0 : index
    %c0_66 = arith.constant 0 : index
    %85 = vector.load %arg8[%c0_64, %c0_65, %c0_66] : memref<2x2x256xf32, #tpu.memory_space<vmem>>, vector<2x2x256xf32>
    tpu.vector_store %arg8[%c0_64, %c0_65, %c0_66], %69 {strides = array<i32>} : memref<2x2x256xf32, #tpu.memory_space<vmem>>, vector<2x2x256xf32>,
    return
  }
}

</mosaic_0001>

<llo_original>
// kernel: tpu_custom_call.1
$region0: #{tpu_custom_call.1}
  #allocation0 [shape = 'u32[]', space=smem, size = 0x4, offset = 0x4, fixed_abs, tag = 'smem constant byte address 0x4 - core index']
  #allocation1 [shape = 'u32[72,128]{1,0:T(1,128)}', space=vmem, size = 0x9000, scoped, tag = 'internal scratch']
  #allocation2 [shape = 'f32[1]{0:T(128)S(6)}', space=smem, size = 0x200, scoped, tag = 'scoped memory for tpu_custom_call.1']
  %s0 = inlined_call_operand.vmem [shape: f32[2,16,256], index: 0, kind: input, shape index: {}]
  %s1 = inlined_call_operand.hbm [shape: f32[2,16,256], index: 1, kind: input, shape index: {}]
  %s2 = inlined_call_operand.vmem [shape: f32[2,16], index: 2, kind: input, shape index: {}]
  %s3 = inlined_call_operand.vmem [shape: f32[2,1], index: 3, kind: input, shape index: {}]
  %s4 = inlined_call_operand.vmem [shape: f32[18,16], index: 4, kind: input, shape index: {}]
  %s5 = inlined_call_operand.vmem [shape: f32[18,1], index: 5, kind: input, shape index: {}]
  %s6 = inlined_call_operand.<no memory space> [shape: f32[1], index: 6, kind: input, shape index: {}]
  %s7 = inlined_call_operand.hbm [shape: f32[2,2,256], index: 7, kind: output, shape index: {0}]
  %s8 = inlined_call_operand.hbm [shape: f32[2,2,256], index: 8, kind: output, shape index: {1}]
  %s9 = inlined_call_operand.hbm [shape: f32[2,16,256], index: 9, kind: output, shape index: {2}]
  %10 = xla_tuple %s7, %s8, %s9
  %s11 = sld [smem:[#allocation0]]
  $region58: #{tpu_custom_call.1} parent=0
    _
  %s13 = ssub.s32 1, %s11
  %s14 = scalar_select 0, %s13, %s11
  %15 = sst [smem:[#allocation2]] %s6
  $region1: #{tpu_custom_call.1} parent=0
    #allocation3 [shape = 'u8[32768]{0}', space=vmem, size = 0x8000, scoped, tag = 'input window, operand 1, single buffered']
    #allocation4 [shape = 's32[1]{0}', space=sflag, size = 0x4, scoped, tag = 'scoped memory for tpu_custom_call.1']
    #allocation5 [shape = 's32[1]{0}', space=sflag, size = 0x4, scoped, tag = 'scoped memory for tpu_custom_call.1']
    #allocation6 [shape = 'u8[4096]{0}', space=vmem, size = 0x1000, scoped, tag = 'output window, operand 0, single buffered']
    #allocation7 [shape = 'u8[4096]{0}', space=vmem, size = 0x1000, scoped, tag = 'output window, operand 1, single buffered']
    #allocation8 [shape = 's32[1]{0}', space=sflag, size = 0x4, scoped, tag = 'scoped memory for tpu_custom_call.1']
    #allocation9 [shape = 'u8[32768]{0}', space=vmem, size = 0x8000, scoped, tag = 'output window, operand 2, single buffered']
    %16 = vsyncpa [#allocation4], 0
    %17 = vsyncpa [#allocation5], 0
    %18 = vsyncpa [#allocation8], 0
    // Predicated region
    $region2: #{tpu_custom_call.1} parent=1 // pred_check
      _
    $region3: #{tpu_custom_call.1} parent=1 // pred_check_branch
      %20 = sbr.rel (0) target = $region5
    $region4: #{tpu_custom_call.1} parent=1 // pred_region
      _
    $region5: #{tpu_custom_call.1} parent=1 // pred_fallthru
      _
    // Predicated region
    $region6: #{tpu_custom_call.1} parent=1 // pred_check
      _
    $region7: #{tpu_custom_call.1} parent=1 // pred_check_branch
      %22 = sbr.rel (0) target = $region9
    $region8: #{tpu_custom_call.1} parent=1 // pred_region
      %24 = vsyncadd [#allocation4], 0
      %s25 = sshll.u32 %s1, 4
      %s26 = int_to_ptr.hbm [resolvable:$true] %s25
      %s27 = sshll.u32 [#allocation3], 4
      %s28 = int_to_ptr.vmem [resolvable:$true] %s27
      %33 = dma.hbm_to_vmem [thread:$0]  %s26, 1024, %s28, [#allocation4], 256, 256, 16
    $region9: #{tpu_custom_call.1} parent=1 // pred_fallthru
      _
    // Predicated region
    $region10: #{tpu_custom_call.1} parent=1 // pred_check
      _
    $region11: #{tpu_custom_call.1} parent=1 // pred_check_branch
      %35 = sbr.rel (0) target = $region13
    $region12: #{tpu_custom_call.1} parent=1 // pred_region
      _
    $region13: #{tpu_custom_call.1} parent=1 // pred_fallthru
      _
    // Predicated region
    $region14: #{tpu_custom_call.1} parent=1 // pred_check
      _
    $region15: #{tpu_custom_call.1} parent=1 // pred_check_branch
      %37 = sbr.rel (0) target = $region17
    $region16: #{tpu_custom_call.1} parent=1 // pred_region
      _
    $region17: #{tpu_custom_call.1} parent=1 // pred_fallthru
      _
    // Predicated region
    $region18: #{tpu_custom_call.1} parent=1 // pred_check
      _
    $region19: #{tpu_custom_call.1} parent=1 // pred_check_branch
      %39 = sbr.rel (0) target = $region21
    $region20: #{tpu_custom_call.1} parent=1 // pred_region
      _
    $region21: #{tpu_custom_call.1} parent=1 // pred_fallthru
      _
    // Predicated region
    $region22: #{tpu_custom_call.1} parent=1 // pred_check
      _
    $region23: #{tpu_custom_call.1} parent=1 // pred_check_branch
      %41 = sbr.rel (0) target = $region25
    $region24: #{tpu_custom_call.1} parent=1 // pred_region
      _
    $region25: #{tpu_custom_call.1} parent=1 // pred_fallthru
      _
    // Predicated region
    $region26: #{tpu_custom_call.1} parent=1 // pred_check
      _
    $region27: #{tpu_custom_call.1} parent=1 // pred_check_branch
      %43 = sbr.rel (0) target = $region29
    $region28: #{tpu_custom_call.1} parent=1 // pred_region
      _
    $region29: #{tpu_custom_call.1} parent=1 // pred_fallthru
      _
    // Predicated region
    $region30: #{tpu_custom_call.1} parent=1 // pred_check
      _
    $region31: #{tpu_custom_call.1} parent=1 // pred_check_branch
      %45 = sbr.rel (0) target = $region33
    $region32: #{tpu_custom_call.1} parent=1 // pred_region
      %47 = dma.done [#allocation4], 1024
    $region33: #{tpu_custom_call.1} parent=1 // pred_fallthru
      _
    %v48 = vld [vmem:[%s2] sm:$0x3]
    %v49 = vld [vmem:[#allocation3] sm:$0xff]
    %v50 = vld [vmem:[#allocation3 + $0x8] sm:$0xff]
    %v51 = vld [vmem:[#allocation3 + $0x10] sm:$0xff]
    %v52 = vld [vmem:[#allocation3 + $0x18] sm:$0xff]
    %v53 = vld [vmem:[%s3] sm:$0x3]
    %55 = vset.pattern.permute.xlu0 0
    %56 = vperm.xlu0 %55, %v53
    %v57 = vpop.permute.xlu0 %56
    %vm59 = vcmask 130048
    %v61 = vsel %vm59, %v48, 0
    %63 = vmatpush.msra.mxu0 0.0
    %64 = vmatpush.msra.mxu0 0.0
    %65 = vmatpush.msra.mxu0 0.0
    %66 = vmatpush.msra.mxu0 0.0
    %67 = vmatpush.msra.mxu0 0.0
    %68 = vmatpush.msra.mxu0 0.0
    %69 = vmatpush.msra.mxu0 0.0
    %70 = vmatpush.msra.mxu0 0.0
    %71 = vmatpush.msra.mxu0 0.0
    %72 = vmatpush.msra.mxu0 0.0
    %73 = vmatpush.msra.mxu0 0.0
    %74 = vmatpush.msra.mxu0 0.0
    %75 = vmatpush.msra.mxu0 0.0
    %76 = vmatpush.msra.mxu0 0.0
    %77 = vmatpush.msra.mxu0 %v51
    %78 = vmatpush.msra.mxu0 %v49
    %79 = vmatmul.f32.gmra.mxu0 %v61
    %v80 = vpop.f32.mrf.mxu0
    %v81 = vadd.f32 %v57, %v80
    %82 = vdwg.mxu0
    %83 = vmatpush.msra.mxu0 0.0
    %84 = vmatpush.msra.mxu0 0.0
    %85 = vmatpush.msra.mxu0 0.0
    %86 = vmatpush.msra.mxu0 0.0
    %87 = vmatpush.msra.mxu0 0.0
    %88 = vmatpush.msra.mxu0 0.0
    %89 = vmatpush.msra.mxu0 0.0
    %90 = vmatpush.msra.mxu0 0.0
    %91 = vmatpush.msra.mxu0 0.0
    %92 = vmatpush.msra.mxu0 0.0
    %93 = vmatpush.msra.mxu0 0.0
    %94 = vmatpush.msra.mxu0 0.0
    %95 = vmatpush.msra.mxu0 0.0
    %96 = vmatpush.msra.mxu0 0.0
    %97 = vmatpush.msra.mxu0 %v52
    %98 = vmatpush.msra.mxu0 %v50
    %99 = vmatmul.f32.gmra.mxu0 %v61
    %v100 = vpop.f32.mrf.mxu0
    %v101 = vadd.f32 %v57, %v100
    %102 = vdwg.mxu0
    %v105 = vrot.slane %v101, 6
    %vm106 = vcmask 1041408
    %v107 = vsel %vm106, %v81, %v105
    %109 = vst [vmem:[#allocation6] sm:$0xf] %v107
    %v110 = vld [vmem:[%s4] sm:$0xff]
    %v111 = vld [vmem:[%s4 + $0x8] sm:$0xff]
    %v112 = vld [vmem:[%s4 + $0x10] sm:$0x3]
    %v113 = vld [vmem:[%s0] sm:$0xff]
    %v114 = vld [vmem:[%s0 + $0x8] sm:$0xff]
    %v115 = vld [vmem:[%s0 + $0x10] sm:$0xff]
    %v116 = vld [vmem:[%s0 + $0x18] sm:$0xff]
    %v117 = vld [vmem:[%s5] sm:$0xff]
    %v118 = vld [vmem:[%s5 + $0x8] sm:$0xff]
    %v119 = vld [vmem:[%s5 + $0x10] sm:$0x3]
    %121 = vset.pattern.permute.xlu0 0
    %122 = vperm.xlu0 %121, %v117
    %v123 = vpop.permute.xlu0 %122
    %126 = vset.pattern.permute.xlu0 0
    %127 = vperm.xlu0 %126, %v118
    %v128 = vpop.permute.xlu0 %127
    %131 = vset.pattern.permute.xlu0 0
    %132 = vperm.xlu0 %131, %v119
    %v133 = vpop.permute.xlu0 %132
    %v136 = vsel %vm59, %v110, 0
    %v139 = vsel %vm59, %v111, 0
    %v142 = vsel %vm59, %v112, 0
    %144 = vmatpush.msra.mxu0 0.0
    %145 = vmatpush.msra.mxu0 0.0
    %146 = vmatpush.msra.mxu0 0.0
    %147 = vmatpush.msra.mxu0 0.0
    %148 = vmatpush.msra.mxu0 0.0
    %149 = vmatpush.msra.mxu0 0.0
    %150 = vmatpush.msra.mxu0 0.0
    %151 = vmatpush.msra.mxu0 0.0
    %152 = vmatpush.msra.mxu0 0.0
    %153 = vmatpush.msra.mxu0 0.0
    %154 = vmatpush.msra.mxu0 0.0
    %155 = vmatpush.msra.mxu0 0.0
    %156 = vmatpush.msra.mxu0 0.0
    %157 = vmatpush.msra.mxu0 0.0
    %158 = vmatpush.msra.mxu0 %v115
    %159 = vmatpush.msra.mxu0 %v113
    %160 = vmatmul.f32.gmra.mxu0 %v136
    %v161 = vpop.f32.mrf.mxu0
    %v162 = vadd.f32 %v123, %v161
    %163 = vmatmul.f32.gmra.mxu0 %v139
    %v164 = vpop.f32.mrf.mxu0
    %v165 = vadd.f32 %v128, %v164
    %166 = vmatmul.f32.gmra.mxu0 %v142
    %v167 = vpop.f32.mrf.mxu0
    %v168 = vadd.f32 %v133, %v167
    %169 = vdwg.mxu0
    %170 = vmatpush.msra.mxu0 0.0
    %171 = vmatpush.msra.mxu0 0.0
    %172 = vmatpush.msra.mxu0 0.0
    %173 = vmatpush.msra.mxu0 0.0
    %174 = vmatpush.msra.mxu0 0.0
    %175 = vmatpush.msra.mxu0 0.0
    %176 = vmatpush.msra.mxu0 0.0
    %177 = vmatpush.msra.mxu0 0.0
    %178 = vmatpush.msra.mxu0 0.0
    %179 = vmatpush.msra.mxu0 0.0
    %180 = vmatpush.msra.mxu0 0.0
    %181 = vmatpush.msra.mxu0 0.0
    %182 = vmatpush.msra.mxu0 0.0
    %183 = vmatpush.msra.mxu0 0.0
    %184 = vmatpush.msra.mxu0 %v116
    %185 = vmatpush.msra.mxu0 %v114
    %186 = vmatmul.f32.gmra.mxu0 %v136
    %v187 = vpop.f32.mrf.mxu0
    %v188 = vadd.f32 %v123, %v187
    %189 = vmatmul.f32.gmra.mxu0 %v139
    %v190 = vpop.f32.mrf.mxu0
    %v191 = vadd.f32 %v128, %v190
    %192 = vmatmul.f32.gmra.mxu0 %v142
    %v193 = vpop.f32.mrf.mxu0
    %v194 = vadd.f32 %v133, %v193
    %195 = vdwg.mxu0
    %s196 = sld [smem:[#allocation2]]
    %v197 = vstv %s196
    %v198 = vmul.f32 %v197, %v162
    %v199 = vmul.f32 %v197, %v188
    %v200 = vmul.f32 %v197, %v165
    %v201 = vmul.f32 %v197, %v191
    %202 = vst [vmem:[#allocation9] sm:$0xff] %v198
    %203 = vst [vmem:[#allocation9 + $0x8] sm:$0xff] %v199
    %204 = vst [vmem:[#allocation9 + $0x10] sm:$0xff] %v200
    %205 = vst [vmem:[#allocation9 + $0x18] sm:$0xff] %v201
    %v208 = vrot.slane %v194, 6
    %v209 = vsel %vm106, %v168, %v208
    %211 = vst [vmem:[#allocation7] sm:$0xf] %v209
    %v212 = vld [vmem:[%s2] sm:$0x3]
    %s213 = scalar_lea.vmem [#allocation3], 32
    %v214 = vld [vmem:[%s213] sm:$0xff]
    %v215 = vld [vmem:[%s213 + $0x8] sm:$0xff]
    %v216 = vld [vmem:[%s213 + $0x10] sm:$0xff]
    %v217 = vld [vmem:[%s213 + $0x18] sm:$0xff]
    %v218 = vld [vmem:[%s3] sm:$0x3]
    %220 = vset.pattern.permute.xlu0 0
    %221 = vperm.xlu0 %220, %v218
    %v222 = vpop.permute.xlu0 %221
    %v225 = vsel %vm59, %v212, 0
    %227 = vmatpush.msra.mxu0 0.0
    %228 = vmatpush.msra.mxu0 0.0
    %229 = vmatpush.msra.mxu0 0.0
    %230 = vmatpush.msra.mxu0 0.0
    %231 = vmatpush.msra.mxu0 0.0
    %232 = vmatpush.msra.mxu0 0.0
    %233 = vmatpush.msra.mxu0 0.0
    %234 = vmatpush.msra.mxu0 0.0
    %235 = vmatpush.msra.mxu0 0.0
    %236 = vmatpush.msra.mxu0 0.0
    %237 = vmatpush.msra.mxu0 0.0
    %238 = vmatpush.msra.mxu0 0.0
    %239 = vmatpush.msra.mxu0 0.0
    %240 = vmatpush.msra.mxu0 0.0
    %241 = vmatpush.msra.mxu0 %v216
    %242 = vmatpush.msra.mxu0 %v214
    %243 = vmatmul.f32.gmra.mxu0 %v225
    %v244 = vpop.f32.mrf.mxu0
    %v245 = vadd.f32 %v222, %v244
    %246 = vdwg.mxu0
    %247 = vmatpush.msra.mxu0 0.0
    %248 = vmatpush.msra.mxu0 0.0
    %249 = vmatpush.msra.mxu0 0.0
    %250 = vmatpush.msra.mxu0 0.0
    %251 = vmatpush.msra.mxu0 0.0
    %252 = vmatpush.msra.mxu0 0.0
    %253 = vmatpush.msra.mxu0 0.0
    %254 = vmatpush.msra.mxu0 0.0
    %255 = vmatpush.msra.mxu0 0.0
    %256 = vmatpush.msra.mxu0 0.0
    %257 = vmatpush.msra.mxu0 0.0
    %258 = vmatpush.msra.mxu0 0.0
    %259 = vmatpush.msra.mxu0 0.0
    %260 = vmatpush.msra.mxu0 0.0
    %261 = vmatpush.msra.mxu0 %v217
    %262 = vmatpush.msra.mxu0 %v215
    %263 = vmatmul.f32.gmra.mxu0 %v225
    %v264 = vpop.f32.mrf.mxu0
    %v265 = vadd.f32 %v222, %v264
    %266 = vdwg.mxu0
    %v269 = vrot.slane %v265, 6
    %v270 = vsel %vm106, %v245, %v269
    %s272 = scalar_lea.vmem [#allocation6], 4
    %273 = vst [vmem:[%s272] sm:$0xf] %v270
    %v274 = vld [vmem:[%s4] sm:$0xff]
    %v275 = vld [vmem:[%s4 + $0x8] sm:$0xff]
    %v276 = vld [vmem:[%s4 + $0x10] sm:$0x3]
    %s277 = scalar_lea.vmem %s0, 32
    %v278 = vld [vmem:[%s277] sm:$0xff]
    %v279 = vld [vmem:[%s277 + $0x8] sm:$0xff]
    %v280 = vld [vmem:[%s277 + $0x10] sm:$0xff]
    %v281 = vld [vmem:[%s277 + $0x18] sm:$0xff]
    %v282 = vld [vmem:[%s5] sm:$0xff]
    %v283 = vld [vmem:[%s5 + $0x8] sm:$0xff]
    %v284 = vld [vmem:[%s5 + $0x10] sm:$0x3]
    %286 = vset.pattern.permute.xlu0 0
    %287 = vperm.xlu0 %286, %v282
    %v288 = vpop.permute.xlu0 %287
    %291 = vset.pattern.permute.xlu0 0
    %292 = vperm.xlu0 %291, %v283
    %v293 = vpop.permute.xlu0 %292
    %296 = vset.pattern.permute.xlu0 0
    %297 = vperm.xlu0 %296, %v284
    %v298 = vpop.permute.xlu0 %297
    %v301 = vsel %vm59, %v274, 0
    %v304 = vsel %vm59, %v275, 0
    %v307 = vsel %vm59, %v276, 0
    %309 = vmatpush.msra.mxu0 0.0
    %310 = vmatpush.msra.mxu0 0.0
    %311 = vmatpush.msra.mxu0 0.0
    %312 = vmatpush.msra.mxu0 0.0
    %313 = vmatpush.msra.mxu0 0.0
    %314 = vmatpush.msra.mxu0 0.0
    %315 = vmatpush.msra.mxu0 0.0
    %316 = vmatpush.msra.mxu0 0.0
    %317 = vmatpush.msra.mxu0 0.0
    %318 = vmatpush.msra.mxu0 0.0
    %319 = vmatpush.msra.mxu0 0.0
    %320 = vmatpush.msra.mxu0 0.0
    %321 = vmatpush.msra.mxu0 0.0
    %322 = vmatpush.msra.mxu0 0.0
    %323 = vmatpush.msra.mxu0 %v280
    %324 = vmatpush.msra.mxu0 %v278
    %325 = vmatmul.f32.gmra.mxu0 %v301
    %v326 = vpop.f32.mrf.mxu0
    %v327 = vadd.f32 %v288, %v326
    %328 = vmatmul.f32.gmra.mxu0 %v304
    %v329 = vpop.f32.mrf.mxu0
    %v330 = vadd.f32 %v293, %v329
    %331 = vmatmul.f32.gmra.mxu0 %v307
    %v332 = vpop.f32.mrf.mxu0
    %v333 = vadd.f32 %v298, %v332
    %334 = vdwg.mxu0
    %335 = vmatpush.msra.mxu0 0.0
    %336 = vmatpush.msra.mxu0 0.0
    %337 = vmatpush.msra.mxu0 0.0
    %338 = vmatpush.msra.mxu0 0.0
    %339 = vmatpush.msra.mxu0 0.0
    %340 = vmatpush.msra.mxu0 0.0
    %341 = vmatpush.msra.mxu0 0.0
    %342 = vmatpush.msra.mxu0 0.0
    %343 = vmatpush.msra.mxu0 0.0
    %344 = vmatpush.msra.mxu0 0.0
    %345 = vmatpush.msra.mxu0 0.0
    %346 = vmatpush.msra.mxu0 0.0
    %347 = vmatpush.msra.mxu0 0.0
    %348 = vmatpush.msra.mxu0 0.0
    %349 = vmatpush.msra.mxu0 %v281
    %350 = vmatpush.msra.mxu0 %v279
    %351 = vmatmul.f32.gmra.mxu0 %v301
    %v352 = vpop.f32.mrf.mxu0
    %v353 = vadd.f32 %v288, %v352
    %354 = vmatmul.f32.gmra.mxu0 %v304
    %v355 = vpop.f32.mrf.mxu0
    %v356 = vadd.f32 %v293, %v355
    %357 = vmatmul.f32.gmra.mxu0 %v307
    %v358 = vpop.f32.mrf.mxu0
    %v359 = vadd.f32 %v298, %v358
    %360 = vdwg.mxu0
    %s361 = sld [smem:[#allocation2]]
    %v362 = vstv %s361
    %v363 = vmul.f32 %v362, %v327
    %v364 = vmul.f32 %v362, %v353
    %v365 = vmul.f32 %v362, %v330
    %v366 = vmul.f32 %v362, %v356
    %s367 = scalar_lea.vmem [#allocation9], 32
    %368 = vst [vmem:[%s367] sm:$0xff] %v363
    %369 = vst [vmem:[%s367 + $0x8] sm:$0xff] %v364
    %370 = vst [vmem:[%s367 + $0x10] sm:$0xff] %v365
    %371 = vst [vmem:[%s367 + $0x18] sm:$0xff] %v366
    %v374 = vrot.slane %v359, 6
    %v375 = vsel %vm106, %v333, %v374
    %s377 = scalar_lea.vmem [#allocation7], 4
    %378 = vst [vmem:[%s377] sm:$0xf] %v375
    %v379 = vld [vmem:[#allocation6] sm:$0xf]
    %v380 = vld [vmem:[#allocation6 + $0x4] sm:$0xf]
    %v381 = vld [vmem:[#allocation7] sm:$0xf]
    %v382 = vld [vmem:[#allocation7 + $0x4] sm:$0xf]
    %385 = vst [vmem:[#allocation1] ss:$4 sm:$0xff] %v379
    %v386 = vld.sshfl [vmem:[#allocation1] sm:$0xff pattern:$0x73625140]
    %v387 = vld.sshfl [vmem:[#allocation1 + $0x8] sm:$0xff pattern:$0x73625140]
    %s388 = scalar_lea.vmem [#allocation1], 32
    %389 = vst [vmem:[%s388] ss:$4 sm:$0xff] %v380
    %v390 = vld.sshfl [vmem:[#allocation1 + $0x20] sm:$0xff pattern:$0x73625140]
    %v391 = vld.sshfl [vmem:[#allocation1 + $0x28] sm:$0xff pattern:$0x73625140]
    %v396 = vsel %vm106, %v386, 0.0
    %v397 = vrot.slane %v396, 4
    %v398 = vadd.f32 %v396, %v397
    %v399 = vrot.slane %v398, 2
    %v400 = vadd.f32 %v398, %v399
    %v401 = vrot.slane %v400, 1
    %v402 = vadd.f32 %v400, %v401
    %v403 = vsel %vm106, %v387, 0.0
    %v404 = vrot.slane %v403, 4
    %v405 = vadd.f32 %v403, %v404
    %v406 = vrot.slane %v405, 2
    %v407 = vadd.f32 %v405, %v406
    %v408 = vrot.slane %v407, 1
    %v409 = vadd.f32 %v407, %v408
    %v410 = vsel %vm106, %v390, 0.0
    %v411 = vrot.slane %v410, 4
    %v412 = vadd.f32 %v410, %v411
    %v413 = vrot.slane %v412, 2
    %v414 = vadd.f32 %v412, %v413
    %v415 = vrot.slane %v414, 1
    %v416 = vadd.f32 %v414, %v415
    %v417 = vsel %vm106, %v391, 0.0
    %v418 = vrot.slane %v417, 4
    %v419 = vadd.f32 %v417, %v418
    %v420 = vrot.slane %v419, 2
    %v421 = vadd.f32 %v419, %v420
    %v422 = vrot.slane %v421, 1
    %v423 = vadd.f32 %v421, %v422
    %v424 = vrcp.pop 2.0
    %v425 = vmul.f32 2.0, %v424
    %v426 = vsub.f32 1.0, %v425
    %v427 = vmul.f32 %v424, %v426
    %v428 = vadd.f32 %v424, %v427
    %vm429 = vweird.f32 %v424
    %v430 = vsel %vm429, %v424, %v428
    %v431 = vmul.f32 %v402, %v430
    %v432 = vmul.f32 %v409, %v430
    %v433 = vmul.f32 %v416, %v430
    %v434 = vmul.f32 %v423, %v430
    %v439 = vrot.slane %v432, 6
    %v440 = vrot.slane %v434, 6
    %v441 = vsel %vm106, %v431, %v439
    %v442 = vsel %vm106, %v433, %v440
    %vm443 = vcmask 1044484
    %v444 = vsel %vm443, %v441, %v441
    %vm445 = vcmask 1046534
    %v446 = vsel %vm445, %v441, %v444
    %v447 = vrot.slane %v442, 7
    %vm448 = vcmask 1041409
    %v449 = vsel %vm448, %v447, %v446
    %vm450 = vcmask 1043459
    %v451 = vsel %vm450, %v447, %v449
    %vm452 = vcmask 1045509
    %v453 = vsel %vm452, %v447, %v451
    %vm454 = vcmask 1047559
    %v455 = vsel %vm454, %v447, %v453
    %v457 = vsub.f32 %v379, %v455
    %v458 = vsub.f32 %v380, %v455
    %461 = vst [vmem:[#allocation1] ss:$4 sm:$0xff] %v381
    %v462 = vld.sshfl [vmem:[#allocation1] sm:$0xff pattern:$0x73625140]
    %v463 = vld.sshfl [vmem:[#allocation1 + $0x8] sm:$0xff pattern:$0x73625140]
    %s464 = scalar_lea.vmem [#allocation1], 32
    %465 = vst [vmem:[%s464] ss:$4 sm:$0xff] %v382
    %v466 = vld.sshfl [vmem:[#allocation1 + $0x20] sm:$0xff pattern:$0x73625140]
    %v467 = vld.sshfl [vmem:[#allocation1 + $0x28] sm:$0xff pattern:$0x73625140]
    %v472 = vsel %vm106, %v462, 0.0
    %v473 = vrot.slane %v472, 4
    %v474 = vadd.f32 %v472, %v473
    %v475 = vrot.slane %v474, 2
    %v476 = vadd.f32 %v474, %v475
    %v477 = vrot.slane %v476, 1
    %v478 = vadd.f32 %v476, %v477
    %v479 = vsel %vm106, %v463, 0.0
    %v480 = vrot.slane %v479, 4
    %v481 = vadd.f32 %v479, %v480
    %v482 = vrot.slane %v481, 2
    %v483 = vadd.f32 %v481, %v482
    %v484 = vrot.slane %v483, 1
    %v485 = vadd.f32 %v483, %v484
    %v486 = vsel %vm106, %v466, 0.0
    %v487 = vrot.slane %v486, 4
    %v488 = vadd.f32 %v486, %v487
    %v489 = vrot.slane %v488, 2
    %v490 = vadd.f32 %v488, %v489
    %v491 = vrot.slane %v490, 1
    %v492 = vadd.f32 %v490, %v491
    %v493 = vsel %vm106, %v467, 0.0
    %v494 = vrot.slane %v493, 4
    %v495 = vadd.f32 %v493, %v494
    %v496 = vrot.slane %v495, 2
    %v497 = vadd.f32 %v495, %v496
    %v498 = vrot.slane %v497, 1
    %v499 = vadd.f32 %v497, %v498
    %v500 = vmul.f32 %v478, %v430
    %v501 = vmul.f32 %v485, %v430
    %v502 = vmul.f32 %v492, %v430
    %v503 = vmul.f32 %v499, %v430
    %v508 = vrot.slane %v501, 6
    %v509 = vrot.slane %v503, 6
    %v510 = vsel %vm106, %v500, %v508
    %v511 = vsel %vm106, %v502, %v509
    %v512 = vsel %vm443, %v510, %v510
    %v513 = vsel %vm445, %v510, %v512
    %v514 = vrot.slane %v511, 7
    %v515 = vsel %vm448, %v514, %v513
    %v516 = vsel %vm450, %v514, %v515
    %v517 = vsel %vm452, %v514, %v516
    %v518 = vsel %vm454, %v514, %v517
    %v520 = vsub.f32 %v381, %v518
    %v521 = vsub.f32 %v382, %v518
    %v522 = vmul.f32 %v457, %v457
    %v523 = vmul.f32 %v458, %v458
    %526 = vst [vmem:[#allocation1] ss:$4 sm:$0xff] %v522
    %v527 = vld.sshfl [vmem:[#allocation1] sm:$0xff pattern:$0x73625140]
    %v528 = vld.sshfl [vmem:[#allocation1 + $0x8] sm:$0xff pattern:$0x73625140]
    %s529 = scalar_lea.vmem [#allocation1], 32
    %530 = vst [vmem:[%s529] ss:$4 sm:$0xff] %v523
    %v531 = vld.sshfl [vmem:[#allocation1 + $0x20] sm:$0xff pattern:$0x73625140]
    %v532 = vld.sshfl [vmem:[#allocation1 + $0x28] sm:$0xff pattern:$0x73625140]
    %v537 = vsel %vm106, %v527, 0.0
    %v538 = vsel %vm106, %v528, 0.0
    %v539 = vadd.f32 %v537, %v538
    %v540 = vsel %vm106, %v531, 0.0
    %v541 = vadd.f32 %v539, %v540
    %v542 = vsel %vm106, %v532, 0.0
    %v543 = vadd.f32 %v541, %v542
    %544 = vadd.xlane.f32.xlu0 %v543
    %v545 = vpop.xlane.xlu0 %544
    %v546 = vrot.slane %v545, 4
    %v547 = vadd.f32 %v545, %v546
    %v548 = vrot.slane %v547, 2
    %v549 = vadd.f32 %v547, %v548
    %v550 = vrot.slane %v549, 1
    %v551 = vadd.f32 %v549, %v550
    %s552 = vtos %v551
    %v553 = vmul.f32 %v520, %v520
    %v554 = vmul.f32 %v521, %v521
    %557 = vst [vmem:[#allocation1] ss:$4 sm:$0xff] %v553
    %v558 = vld.sshfl [vmem:[#allocation1] sm:$0xff pattern:$0x73625140]
    %v559 = vld.sshfl [vmem:[#allocation1 + $0x8] sm:$0xff pattern:$0x73625140]
    %s560 = scalar_lea.vmem [#allocation1], 32
    %561 = vst [vmem:[%s560] ss:$4 sm:$0xff] %v554
    %v562 = vld.sshfl [vmem:[#allocation1 + $0x20] sm:$0xff pattern:$0x73625140]
    %v563 = vld.sshfl [vmem:[#allocation1 + $0x28] sm:$0xff pattern:$0x73625140]
    %v568 = vsel %vm106, %v558, 0.0
    %v569 = vsel %vm106, %v559, 0.0
    %v570 = vadd.f32 %v568, %v569
    %v571 = vsel %vm106, %v562, 0.0
    %v572 = vadd.f32 %v570, %v571
    %v573 = vsel %vm106, %v563, 0.0
    %v574 = vadd.f32 %v572, %v573
    %575 = vadd.xlane.f32.xlu0 %v574
    %v576 = vpop.xlane.xlu0 %575
    %v577 = vrot.slane %v576, 4
    %v578 = vadd.f32 %v576, %v577
    %v579 = vrot.slane %v578, 2
    %v580 = vadd.f32 %v578, %v579
    %v581 = vrot.slane %v580, 1
    %v582 = vadd.f32 %v580, %v581
    %s583 = vtos %v582
    %s584 = smul.f32 %s552, %s583
    %v585 = vstv %s584
    %v586 = vrsqrt.pop %v585
    %v587 = vmul.f32 %v586, %v585
    %v588 = vmul.f32 %v587, %v586
    %v589 = vmul.f32 0.5, %v588
    %v590 = vsub.f32 1.5, %v589
    %v591 = vmul.f32 %v586, %v590
    %vm592 = vweird.f32 %v585
    %vm593 = vweird.f32 %v586
    %vm594 = vmor %vm592, %vm593
    %v595 = vsel %vm594, %v586, %v591
    %s596 = vtos %v595
    %v597 = vstv %s596
    %v598 = vmul.f32 %v457, %v597
    %v599 = vmul.f32 %v458, %v597
    %600 = vst [vmem:[#allocation6] sm:$0xf] %v598
    %601 = vst [vmem:[#allocation6 + $0x4] sm:$0xf] %v599
    %602 = vst [vmem:[#allocation7] sm:$0xf] %v520
    %603 = vst [vmem:[#allocation7 + $0x4] sm:$0xf] %v521
    // Predicated region
    $region34: #{tpu_custom_call.1} parent=1 // pred_check
      _
    $region35: #{tpu_custom_call.1} parent=1 // pred_check_branch
      %605 = sbr.rel (0) target = $region37
    $region36: #{tpu_custom_call.1} parent=1 // pred_region
      %607 = vsyncadd [#allocation5], 0
      %s608 = sshll.u32 [#allocation6], 4
      %s609 = int_to_ptr.vmem [resolvable:$true] %s608
      %s610 = sshll.u32 %s7, 4
      %s611 = int_to_ptr.hbm [resolvable:$true] %s610
      %616 = dma.vmem_to_hbm [thread:$0]  %s609, 128, %s611, [#allocation5], 64, 64, 4
    $region37: #{tpu_custom_call.1} parent=1 // pred_fallthru
      _
    // Predicated region
    $region38: #{tpu_custom_call.1} parent=1 // pred_check
      _
    $region39: #{tpu_custom_call.1} parent=1 // pred_check_branch
      %618 = sbr.rel (0) target = $region41
    $region40: #{tpu_custom_call.1} parent=1 // pred_region
      %620 = vsyncadd [#allocation8], 0
      %s621 = sshll.u32 [#allocation7], 4
      %s622 = int_to_ptr.vmem [resolvable:$true] %s621
      %s623 = sshll.u32 %s8, 4
      %s624 = int_to_ptr.hbm [resolvable:$true] %s623
      %629 = dma.vmem_to_hbm [thread:$0]  %s622, 128, %s624, [#allocation8], 64, 64, 4
    $region41: #{tpu_custom_call.1} parent=1 // pred_fallthru
      _
    // Predicated region
    $region42: #{tpu_custom_call.1} parent=1 // pred_check
      _
    $region43: #{tpu_custom_call.1} parent=1 // pred_check_branch
      %631 = sbr.rel (0) target = $region45
    $region44: #{tpu_custom_call.1} parent=1 // pred_region
      %633 = vsyncadd [#allocation8], 0
      %s634 = sshll.u32 [#allocation9], 4
      %s635 = int_to_ptr.vmem [resolvable:$true] %s634
      %s636 = sshll.u32 %s9, 4
      %s637 = int_to_ptr.hbm [resolvable:$true] %s636
      %642 = dma.vmem_to_hbm [thread:$0]  %s635, 1024, %s637, [#allocation8], 256, 256, 16
    $region45: #{tpu_custom_call.1} parent=1 // pred_fallthru
      _
    // Predicated region
    $region46: #{tpu_custom_call.1} parent=1 // pred_check
      _
    $region47: #{tpu_custom_call.1} parent=1 // pred_check_branch
      %644 = sbr.rel (0) target = $region49
    $region48: #{tpu_custom_call.1} parent=1 // pred_region
      %646 = dma.done [#allocation5], 128
    $region49: #{tpu_custom_call.1} parent=1 // pred_fallthru
      _
    // Predicated region
    $region50: #{tpu_custom_call.1} parent=1 // pred_check
      _
    $region51: #{tpu_custom_call.1} parent=1 // pred_check_branch
      %648 = sbr.rel (0) target = $region53
    $region52: #{tpu_custom_call.1} parent=1 // pred_region
      %650 = dma.done [#allocation8], 128
    $region53: #{tpu_custom_call.1} parent=1 // pred_fallthru
      _
    // Predicated region
    $region54: #{tpu_custom_call.1} parent=1 // pred_check
      _
    $region55: #{tpu_custom_call.1} parent=1 // pred_check_branch
      %652 = sbr.rel (0) target = $region57
    $region56: #{tpu_custom_call.1} parent=1 // pred_region
      %654 = dma.done [#allocation8], 1024
    $region57: #{tpu_custom_call.1} parent=1 // pred_fallthru
      _
    %655 = vsyncpa [#allocation4], 1
    %656 = vsyncpa [#allocation5], 1
    %657 = vsyncpa [#allocation8], 1

</llo_original>
